<compile_context>
chip_gen: v6e
topology: v6e:2x2x1
jax: 0.10.0
libtpu: 0.0.40
codegen_flags: <defaults>
</compile_context>

<pallas_src>
import jax
import jax.numpy as jnp
import numpy as np
from jax.experimental import pallas as pl
from jax.experimental.pallas import tpu as pltpu


def _identity_passthrough_kernel(x_ref, o_ref):
    # Output buffer is aliased to the input buffer: the bytes are already in
    # place.  touch() pins a fake read+write dependency so the aliased output
    # is considered produced by this kernel; no data is moved.
    del x_ref
    pltpu.touch(o_ref)


def _identity_dma_copy_kernel(x_hbm, o_hbm, sem):
    # Single whole-array HBM->HBM DMA: no VMEM staging, no vld/vst slot usage.
    cp = pltpu.make_async_copy(x_hbm, o_hbm, sem)
    cp.start()
    cp.wait()


def identity_pallas_passthrough(x: jax.Array) -> jax.Array:
    """Zero-DMA identity: aliased no-op pass-through of the HBM buffer."""
    return pl.pallas_call(
        _identity_passthrough_kernel,
        out_shape=jax.ShapeDtypeStruct(x.shape, x.dtype),
        in_specs=[pl.BlockSpec(memory_space=pl.ANY)],
        out_specs=pl.BlockSpec(memory_space=pl.ANY),
        input_output_aliases={0: 0},
        compiler_params=pltpu.CompilerParams(has_side_effects=True),
    )(x)


def identity_pallas_copy(x: jax.Array) -> jax.Array:
    """Identity that materializes a distinct output via one HBM->HBM DMA."""
    return pl.pallas_call(
        _identity_dma_copy_kernel,
        out_shape=jax.ShapeDtypeStruct(x.shape, x.dtype),
        in_specs=[pl.BlockSpec(memory_space=pl.ANY)],
        out_specs=pl.BlockSpec(memory_space=pl.ANY),
        scratch_shapes=[pltpu.SemaphoreType.DMA(())],
    )(x)


_USE_PASSTHROUGH = None  # resolved on first call


def identity_pallas(x: jax.Array) -> jax.Array:
    """Identity forward: returns an array equal to `x` (same shape & dtype)."""
    global _USE_PASSTHROUGH
    if x.size == 0:
        return x  # nothing to hand through
    if _USE_PASSTHROUGH is None:
        try:
            out = identity_pallas_passthrough(x)
            _USE_PASSTHROUGH = True
            return out
        except Exception:
            # Lowering of the no-op aliased path not supported on this
            # backend -> fall back to the single HBM->HBM DMA copy.
            _USE_PASSTHROUGH = False
    if _USE_PASSTHROUGH:
        return identity_pallas_passthrough(x)
    return identity_pallas_copy(x)


if __name__ == "__main__":
    key = jax.random.PRNGKey(0)
    # NCHW input, small shape consistent with the module: batch=2, channels=4,
    # spatial 16x16.
    x = jax.random.normal(key, (2, 4, 16, 16), dtype=jnp.float32)

    # Snapshot reference values on host before running the (aliased) kernel.
    x_host = np.asarray(jax.device_get(x))

    y = identity_pallas(x)
    jax.block_until_ready(y)
    y_host = np.asarray(jax.device_get(y))

    assert y_host.shape == x_host.shape, (y_host.shape, x_host.shape)
    assert y_host.dtype == x_host.dtype, (y_host.dtype, x_host.dtype)
    assert np.array_equal(y_host, x_host), "Identity kernel output differs from input"

    print("KERNEL_OK")
</pallas_src>

<mosaic_0001>
module attributes {stable_mosaic.version = 11 : i64} {
  func.func @_identity_passthrough_kernel(%arg0: memref<2x4x16x16xf32, #tpu.memory_space<any>>, %arg1: memref<2x4x16x16xf32, #tpu.memory_space<any>>) attributes {dimension_semantics = [], scalar_prefetch = 0 : i64, scratch_operands = 0 : i64, tpu.core_type = #tpu.core_type<tc>} {
    return
  }
}

module attributes {stable_mosaic.version = 11 : i64} {
  func.func @_identity_dma_copy_kernel(%arg0: memref<2x4x16x16xf32, #tpu.memory_space<any>>, %arg1: memref<2x4x16x16xf32, #tpu.memory_space<any>>, %arg2: memref<!tpu.dma_semaphore, #tpu.memory_space<semaphore_mem>>) attributes {dimension_semantics = [], scalar_prefetch = 0 : i64, scratch_operands = 1 : i64, tpu.core_type = #tpu.core_type<tc>} {
    tpu.enqueue_dma source(%arg0 : memref<2x4x16x16xf32, #tpu.memory_space<any>>) target(%arg1 : memref<2x4x16x16xf32, #tpu.memory_space<any>>) target_semaphore(%arg2 : memref<!tpu.dma_semaphore, #tpu.memory_space<semaphore_mem>>)
    tpu.wait_dma2 semaphore(%arg2 : memref<!tpu.dma_semaphore, #tpu.memory_space<semaphore_mem>>) src(%arg0 : memref<2x4x16x16xf32, #tpu.memory_space<any>>) dst(%arg1 : memref<2x4x16x16xf32, #tpu.memory_space<any>>)
    return
  }
}

</mosaic_0001>

<llo_original>
// kernel: tpu_custom_call.1
$region0: #{tpu_custom_call.1}
  #allocation0 [shape = 'u32[]', space=smem, size = 0x4, offset = 0x4, fixed_abs, tag = 'smem constant byte address 0x4 - core index']
  #allocation1 [shape = 'u32[144,128]{1,0:T(1,128)}', space=vmem, size = 0x12000, scoped, tag = 'internal scratch']
  %s0 = inlined_call_operand.hbm [shape: f32[2,4,16,16], index: 0, kind: input, shape index: {}, may-alias: {0,1}]
  %s1 = inlined_call_operand.hbm [shape: f32[2,4,16,16], index: 1, kind: output, shape index: {}, may-alias: {0,1}]
  %s2 = sld [smem:[#allocation0]]
  $region2: #{tpu_custom_call.1} parent=0
    _
  %s4 = ssub.s32 1, %s2
  %s5 = scalar_select 0, %s4, %s2

// kernel: tpu_custom_call.1
$region0: #{tpu_custom_call.1}
  #allocation0 [shape = 'u32[]', space=smem, size = 0x4, offset = 0x4, fixed_abs, tag = 'smem constant byte address 0x4 - core index']
  #allocation1 [shape = 'u32[144,128]{1,0:T(1,128)}', space=vmem, size = 0x12000, scoped, tag = 'internal scratch']
  #allocation2 [shape = 's32[1]{0}', space=sflag, size = 0x4, scoped, tag = 'scratch operand']
  #allocation3 [shape = 's32[]', space=sflag, size = 0x4, offset = 0, fixed_abs, tag = 'sflag constant byte address 0x0 - dummy sync flag']
  #allocation4 [shape = 'u32[0]{0}', space=smem, size = 0, offset = 0, fixed_abs, tag = 'smem constant byte address 0x0 - null']
  %s0 = inlined_call_operand.hbm [shape: f32[2,4,16,16], index: 0, kind: input, shape index: {}]
  %s1 = inlined_call_operand.hbm [shape: f32[2,4,16,16], index: 1, kind: output, shape index: {}]
  %s2 = sld [smem:[#allocation0]]
  $region2: #{tpu_custom_call.1} parent=0
    _
  %s4 = ssub.s32 1, %s2
  %s5 = scalar_select 0, %s4, %s2
  %s7 = sshll.u32 1, 14
  %s8 = sxor.u32 4294967295, %s7
  %12 = dma.general %s0, 2048, %s1, [#allocation2], 131072, [#allocation4], 0, 0
  %s13 = smul.u32 2, 4
  %s14 = smul.u32 %s13, 16
  %s15 = smul.u32 %s14, 1
  %s16 = sshll.u32 %s15, 4
  %17 = dma.done [#allocation2], %s16
  %18 = vsyncmov [#allocation2]
  %s19 = vpop.sfrf %18
  %p20 = scmp.eq.s32.totalorder %s19, 0
  %p21 = pneg %p20
  %23 = shalt.err (%p21)

</llo_original>
